<compile_context>
chip_gen: v5e
topology: v5e:2x2
jax: 0.10.0
libtpu: 0.0.40
codegen_flags: <defaults>
</compile_context>

<pallas_src>
import math

import numpy as np
import jax
import jax.numpy as jnp
from jax import lax
from jax.experimental import pallas as pl
from jax.experimental.pallas import tpu as pltpu

# ----------------------------- config (small, consistent with the module) ----
N_BLOCKS = 2          # n_blocks
INPUT_SIZE = 8        # input_size (flow dimension D)
HIDDEN_SIZE = 32      # hidden_size
N_HIDDEN = 1          # n_hidden
BATCH = 8             # batch size
EPS = 1e-5            # BatchNorm eps

assert HIDDEN_SIZE >= 4 * INPUT_SIZE  # v0 row packs [b_out(2D) | gamma(D) | beta(D)]

# ----------------------------- packed-parameter layout (static offsets) ------
# Single slab, width HIDDEN_SIZE = 32.  Per block (ROWS_PER_BLOCK rows):
#   [WIN_OFF  .. +D )     win_t            (D, H)
#   [WHID_OFF .. +NH*H)   whid_t[j]        (H, H) each
#   [WOUT_OFF .. +H )     wout_t           (H, 2D) padded to width H (lanes >= 2D are 0)
#   [BIN_OFF]             b_in             (1, H)
#   [BHID_OFF .. +NH)     b_hid[j]         (1, H) each
#   [V0_OFF]              [b_out_m | b_out_loga | gamma | beta]   (lanes 0:4D)
#   [V1_OFF]              [log_gamma | zeros]                      (lanes 0:D)
WIN_OFF = 0
WHID_OFF = INPUT_SIZE
WOUT_OFF = INPUT_SIZE + N_HIDDEN * HIDDEN_SIZE
BIN_OFF = WOUT_OFF + HIDDEN_SIZE
BHID_OFF = BIN_OFF + 1
V0_OFF = BHID_OFF + N_HIDDEN
V1_OFF = V0_OFF + 1
ROWS_PER_BLOCK = V1_OFF + 1                      # 76
P_ROWS = N_BLOCKS * ROWS_PER_BLOCK               # 152


# ----------------------------- mask construction (glue, plain numpy) ---------
def create_masks_np(input_size, hidden_size, n_hidden, input_degrees=None):
    """Sequential-order MADE masks (mirrors create_masks in the PyTorch code)."""
    degrees = []
    degrees.append(np.arange(input_size) if input_degrees is None else np.asarray(input_degrees))
    for _ in range(n_hidden + 1):
        degrees.append(np.arange(hidden_size) % (input_size - 1))
    if input_degrees is None:
        degrees.append(np.arange(input_size) % input_size - 1)
    else:
        degrees.append(np.asarray(input_degrees) % input_size - 1)
    masks = [(d1[:, None] >= d0[None, :]).astype(np.float32)
             for d0, d1 in zip(degrees[:-1], degrees[1:])]
    return masks, degrees[0]


# ----------------------------- parameter init (deterministic, glue) ----------
def linear_params(key, fan_in, fan_out):
    """nn.Linear-style init: U(-1/sqrt(fan_in), 1/sqrt(fan_in)) for W and b."""
    bound = 1.0 / math.sqrt(fan_in)
    kw, kb = jax.random.split(key)
    w = jax.random.uniform(kw, (fan_out, fan_in), jnp.float32, -bound, bound)
    b = jax.random.uniform(kb, (fan_out,), jnp.float32, -bound, bound)
    return w, b


def build_maf_params(key):
    """Per-block pre-masked, pre-transposed weights + BatchNorm params (unpacked)."""
    blocks = []
    input_degrees = None
    for _ in range(N_BLOCKS):
        masks, in_deg = create_masks_np(INPUT_SIZE, HIDDEN_SIZE, N_HIDDEN, input_degrees)
        input_degrees = in_deg[::-1].copy()  # .flip(0) for the next block

        # input masked linear: input_size -> hidden_size
        key, sub = jax.random.split(key)
        w, b = linear_params(sub, INPUT_SIZE, HIDDEN_SIZE)
        win_t = (w * jnp.asarray(masks[0])).T            # (D, H)
        b_in = b                                         # (H,)

        # hidden masked linears: hidden -> hidden (n_hidden of them)
        whid_t, b_hid = [], []
        for j in range(N_HIDDEN):
            key, sub = jax.random.split(key)
            w, b = linear_params(sub, HIDDEN_SIZE, HIDDEN_SIZE)
            whid_t.append((w * jnp.asarray(masks[1 + j])).T)   # (H, H)
            b_hid.append(b)                                    # (H,)

        # output masked linear: hidden -> 2*input, mask repeated (2, 1)
        key, sub = jax.random.split(key)
        w, b = linear_params(sub, HIDDEN_SIZE, 2 * INPUT_SIZE)
        out_mask = jnp.asarray(np.tile(masks[-1], (2, 1)))     # (2D, H)
        wout_t = (w * out_mask).T                              # (H, 2D), cols = [m | loga]
        b_out = b                                              # (2D,)

        # BatchNorm params (log_gamma = 0, beta = 0, as in the module)
        log_gamma = jnp.zeros((INPUT_SIZE,), jnp.float32)
        beta = jnp.zeros((INPUT_SIZE,), jnp.float32)

        blocks.append(dict(win_t=win_t, b_in=b_in, whid_t=whid_t, b_hid=b_hid,
                           wout_t=wout_t, b_out=b_out,
                           log_gamma=log_gamma, beta=beta))
    return blocks


def pack_params(blocks):
    """Pack all parameters into ONE flat (P_ROWS, HIDDEN_SIZE) f32 slab (single DMA)."""
    rows = []
    for blk in blocks:
        rows.append(blk["win_t"])                                          # (D, H)
        rows.extend(blk["whid_t"])                                         # NH x (H, H)
        rows.append(jnp.pad(blk["wout_t"],
                            ((0, 0), (0, HIDDEN_SIZE - 2 * INPUT_SIZE))))  # (H, H)
        rows.append(blk["b_in"][None, :])                                  # (1, H)
        rows.extend(bh[None, :] for bh in blk["b_hid"])                    # NH x (1, H)
        v0 = jnp.concatenate([blk["b_out"],                                # lanes 0:2D
                              jnp.exp(blk["log_gamma"]),                   # lanes 2D:3D
                              blk["beta"]])                                # lanes 3D:4D
        rows.append(jnp.pad(v0, (0, HIDDEN_SIZE - 4 * INPUT_SIZE))[None, :])
        rows.append(jnp.pad(blk["log_gamma"],
                            (0, HIDDEN_SIZE - INPUT_SIZE))[None, :])       # lanes 0:D
    p = jnp.concatenate(rows, axis=0)
    assert p.shape == (P_ROWS, HIDDEN_SIZE), p.shape
    return p


# ----------------------------- Pallas kernel ---------------------------------
def maf_kernel(x_ref, p_ref, out_ref):
    x = x_ref[...]                                   # (N, D) f32
    n = x.shape[0]
    d = INPUT_SIZE

    sum_neg_loga = jnp.zeros_like(x)                 # (N, D) accumulator for -loga
    bn_logdet = jnp.zeros((1, d), jnp.float32)       # per-feature BN log-det accumulator

    for blk in range(N_BLOCKS):
        base = blk * ROWS_PER_BLOCK

        # ---- MADE block (all parameter slices are static offsets into the packed slab) ----
        win = p_ref[base + WIN_OFF:base + WIN_OFF + d, :]                  # (D, H)
        b_in = p_ref[base + BIN_OFF:base + BIN_OFF + 1, :]                 # (1, H)
        h = jnp.dot(x, win, preferred_element_type=jnp.float32) + b_in
        for j in range(N_HIDDEN):
            hw0 = base + WHID_OFF + j * HIDDEN_SIZE
            wh = p_ref[hw0:hw0 + HIDDEN_SIZE, :]                           # (H, H)
            bh = p_ref[base + BHID_OFF + j:base + BHID_OFF + j + 1, :]     # (1, H)
            h = jnp.dot(jnp.maximum(h, 0.0), wh,
                        preferred_element_type=jnp.float32) + bh
        hr = jnp.maximum(h, 0.0)

        # single fused output head: (N, H) @ (H, 2D padded to H) -> lane-slice m / loga
        wout = p_ref[base + WOUT_OFF:base + WOUT_OFF + HIDDEN_SIZE, :]     # (H, H), lanes>=2D are 0
        v0 = p_ref[base + V0_OFF:base + V0_OFF + 1, :]                     # (1, H)
        v1 = p_ref[base + V1_OFF:base + V1_OFF + 1, :]                     # (1, H)
        res = jnp.dot(hr, wout, preferred_element_type=jnp.float32) + v0   # (N, H)
        m = res[:, 0:d]
        loga = res[:, d:2 * d]
        gamma = v0[:, 2 * d:3 * d]                                         # exp(log_gamma), packed
        beta = v0[:, 3 * d:4 * d]
        log_gamma = v1[:, 0:d]

        x = (x - m) * jnp.exp(-loga)
        sum_neg_loga = sum_neg_loga - loga

        # ---- BatchNorm (training mode: batch mean, unbiased batch var = torch.var) ----
        mean = jnp.mean(x, axis=0, keepdims=True)                          # (1, D)
        var = jnp.sum((x - mean) ** 2, axis=0, keepdims=True) * (1.0 / (n - 1))
        inv_std = lax.rsqrt(var + EPS)
        x = gamma * ((x - mean) * inv_std) + beta
        bn_logdet = bn_logdet + (log_gamma - 0.5 * jnp.log(var + EPS))     # (1, D)

    # one lane-dense store: [u | sum_logdet] in a single (N, 2D) block
    out_ref[...] = jnp.concatenate([x, sum_neg_loga + bn_logdet], axis=-1)


# ----------------------------- wrapper ----------------------------------------
def _cost_estimate(n):
    mm_flops = N_BLOCKS * (2 * n * INPUT_SIZE * HIDDEN_SIZE
                           + N_HIDDEN * 2 * n * HIDDEN_SIZE * HIDDEN_SIZE
                           + 2 * n * HIDDEN_SIZE * 2 * INPUT_SIZE)
    ew_flops = N_BLOCKS * (14 * n * INPUT_SIZE)               # elementwise / reductions (rough)
    transcendentals = N_BLOCKS * (n * INPUT_SIZE + 2 * INPUT_SIZE)
    bytes_accessed = 4 * (n * INPUT_SIZE                      # x
                          + P_ROWS * HIDDEN_SIZE              # packed param slab
                          + n * 2 * INPUT_SIZE)               # [u | logdet] output
    return pl.CostEstimate(flops=int(mm_flops + ew_flops),
                           transcendentals=int(transcendentals),
                           bytes_accessed=int(bytes_accessed))


@jax.jit
def maf_forward(x, p):
    n, d = x.shape
    out = pl.pallas_call(
        maf_kernel,
        out_shape=jax.ShapeDtypeStruct((n, 2 * d), jnp.float32),
        in_specs=[pl.BlockSpec(memory_space=pltpu.MemorySpace.VMEM)] * 2,
        out_specs=pl.BlockSpec(memory_space=pltpu.MemorySpace.VMEM),
        cost_estimate=_cost_estimate(n),
    )(x, p)
    return out[:, :d], out[:, d:]


# ----------------------------- pure-JAX reference (independent of packing) ----
def maf_forward_ref(x, blocks):
    n = x.shape[0]
    d = INPUT_SIZE
    sld = jnp.zeros_like(x)
    for blk in blocks:
        h = x @ blk["win_t"] + blk["b_in"]
        for wh, bh in zip(blk["whid_t"], blk["b_hid"]):
            h = jnp.maximum(h, 0.0) @ wh + bh
        hr = jnp.maximum(h, 0.0)
        res = hr @ blk["wout_t"] + blk["b_out"]
        m, loga = res[:, :d], res[:, d:]
        x = (x - m) * jnp.exp(-loga)
        sld = sld - loga
        mean = jnp.mean(x, axis=0, keepdims=True)
        var = jnp.sum((x - mean) ** 2, axis=0, keepdims=True) / (n - 1)
        x_hat = (x - mean) / jnp.sqrt(var + EPS)
        x = jnp.exp(blk["log_gamma"]) * x_hat + blk["beta"]
        sld = sld + (blk["log_gamma"][None, :] - 0.5 * jnp.log(var + EPS))
    return x, sld


# ----------------------------- main -------------------------------------------
if __name__ == "__main__":
    key = jax.random.PRNGKey(0)
    key_params, key_x = jax.random.split(key)

    blocks = build_maf_params(key_params)
    p = pack_params(blocks)
    x = jax.random.normal(key_x, (BATCH, INPUT_SIZE), dtype=jnp.float32)

    u, logdet = maf_forward(x, p)
    jax.block_until_ready((u, logdet))

    u_ref, logdet_ref = maf_forward_ref(x, blocks)
    assert u.shape == (BATCH, INPUT_SIZE) and logdet.shape == (BATCH, INPUT_SIZE)
    np.testing.assert_allclose(np.asarray(u), np.asarray(u_ref), rtol=1e-4, atol=1e-4)
    np.testing.assert_allclose(np.asarray(logdet), np.asarray(logdet_ref), rtol=1e-4, atol=1e-4)

    print("KERNEL_OK")
</pallas_src>

<mosaic_0001>
module attributes {stable_mosaic.version = 11 : i64} {
  func.func @maf_kernel(%arg0: memref<8x8xf32, #tpu.memory_space<vmem>>, %arg1: memref<152x32xf32, #tpu.memory_space<vmem>>, %arg2: memref<8x16xf32, #tpu.memory_space<vmem>>) attributes {dimension_semantics = [], scalar_prefetch = 0 : i64, scratch_operands = 0 : i64, tpu.core_type = #tpu.core_type<tc>} {
    %c0 = arith.constant 0 : index
    %c0_0 = arith.constant 0 : index
    %0 = vector.load %arg0[%c0, %c0_0] : memref<8x8xf32, #tpu.memory_space<vmem>>, vector<8x8xf32>
    %cst = arith.constant 0.000000e+00 : f32
    %1 = vector.broadcast %cst : f32 to vector<8x8xf32>
    %cst_1 = arith.constant 0.000000e+00 : f32
    %2 = vector.broadcast %cst_1 : f32 to vector<1x8xf32>
    %c0_2 = arith.constant 0 : index
    %c0_3 = arith.constant 0 : index
    %3 = vector.load %arg1[%c0_2, %c0_3] : memref<152x32xf32, #tpu.memory_space<vmem>>, vector<8x32xf32>
    %c72 = arith.constant 72 : index
    %c0_4 = arith.constant 0 : index
    %4 = vector.load %arg1[%c72, %c0_4] : memref<152x32xf32, #tpu.memory_space<vmem>>, vector<1x32xf32>
    %cst_5 = arith.constant dense<0.000000e+00> : vector<8x32xf32>
    %5 = tpu.matmul %0, %3, %cst_5 {dimension_numbers = #tpu.dot_dimension_numbers<[1], [0], [0], [1], [0, 0, 1, 1], [], []>} : vector<8x8xf32>, vector<8x32xf32>, vector<8x32xf32> -> vector<8x32xf32>
    %6 = vector.broadcast %4 : vector<1x32xf32> to vector<8x32xf32>
    %7 = arith.addf %5, %6 : vector<8x32xf32>
    %c8 = arith.constant 8 : index
    %c0_6 = arith.constant 0 : index
    %8 = vector.load %arg1[%c8, %c0_6] : memref<152x32xf32, #tpu.memory_space<vmem>>, vector<32x32xf32>
    %c73 = arith.constant 73 : index
    %c0_7 = arith.constant 0 : index
    %9 = vector.load %arg1[%c73, %c0_7] : memref<152x32xf32, #tpu.memory_space<vmem>>, vector<1x32xf32>
    %cst_8 = arith.constant 0.000000e+00 : f32
    %10 = vector.broadcast %cst_8 : f32 to vector<8x32xf32>
    %11 = arith.maximumf %7, %10 : vector<8x32xf32>
    %cst_9 = arith.constant dense<0.000000e+00> : vector<8x32xf32>
    %12 = tpu.matmul %11, %8, %cst_9 {dimension_numbers = #tpu.dot_dimension_numbers<[1], [0], [0], [1], [0, 0, 1, 1], [], []>} : vector<8x32xf32>, vector<32x32xf32>, vector<8x32xf32> -> vector<8x32xf32>
    %13 = vector.broadcast %9 : vector<1x32xf32> to vector<8x32xf32>
    %14 = arith.addf %12, %13 : vector<8x32xf32>
    %cst_10 = arith.constant 0.000000e+00 : f32
    %15 = vector.broadcast %cst_10 : f32 to vector<8x32xf32>
    %16 = arith.maximumf %14, %15 : vector<8x32xf32>
    %c40 = arith.constant 40 : index
    %c0_11 = arith.constant 0 : index
    %17 = vector.load %arg1[%c40, %c0_11] : memref<152x32xf32, #tpu.memory_space<vmem>>, vector<32x32xf32>
    %c74 = arith.constant 74 : index
    %c0_12 = arith.constant 0 : index
    %18 = vector.load %arg1[%c74, %c0_12] : memref<152x32xf32, #tpu.memory_space<vmem>>, vector<1x32xf32>
    %c75 = arith.constant 75 : index
    %c0_13 = arith.constant 0 : index
    %19 = vector.load %arg1[%c75, %c0_13] : memref<152x32xf32, #tpu.memory_space<vmem>>, vector<1x32xf32>
    %cst_14 = arith.constant dense<0.000000e+00> : vector<8x32xf32>
    %20 = tpu.matmul %16, %17, %cst_14 {dimension_numbers = #tpu.dot_dimension_numbers<[1], [0], [0], [1], [0, 0, 1, 1], [], []>} : vector<8x32xf32>, vector<32x32xf32>, vector<8x32xf32> -> vector<8x32xf32>
    %21 = vector.broadcast %18 : vector<1x32xf32> to vector<8x32xf32>
    %22 = arith.addf %20, %21 : vector<8x32xf32>
    %23 = vector.extract_strided_slice %22 {offsets = [0, 0], sizes = [8, 8], strides = [1, 1]} : vector<8x32xf32> to vector<8x8xf32>
    %24 = vector.extract_strided_slice %22 {offsets = [0, 8], sizes = [8, 8], strides = [1, 1]} : vector<8x32xf32> to vector<8x8xf32>
    %25 = vector.extract_strided_slice %18 {offsets = [0, 16], sizes = [1, 8], strides = [1, 1]} : vector<1x32xf32> to vector<1x8xf32>
    %26 = vector.extract_strided_slice %18 {offsets = [0, 24], sizes = [1, 8], strides = [1, 1]} : vector<1x32xf32> to vector<1x8xf32>
    %27 = vector.extract_strided_slice %19 {offsets = [0, 0], sizes = [1, 8], strides = [1, 1]} : vector<1x32xf32> to vector<1x8xf32>
    %28 = arith.subf %0, %23 : vector<8x8xf32>
    %cst_15 = arith.constant 0.000000e+00 : f32
    %29 = vector.broadcast %cst_15 : f32 to vector<8x8xf32>
    %30 = arith.subf %29, %24 : vector<8x8xf32>
    %31 = math.exp %30 : vector<8x8xf32>
    %32 = arith.mulf %28, %31 : vector<8x8xf32>
    %33 = arith.subf %1, %24 : vector<8x8xf32>
    %cst_16 = arith.constant dense<0.000000e+00> : vector<8xf32>
    %34 = vector.multi_reduction <add>, %32, %cst_16 [0] : vector<8x8xf32> to vector<8xf32>
    %35 = vector.shape_cast %34 : vector<8xf32> to vector<1x8xf32>
    %cst_17 = arith.constant 8.000000e+00 : f32
    %36 = vector.broadcast %cst_17 : f32 to vector<1x8xf32>
    %37 = arith.divf %35, %36 : vector<1x8xf32>
    %38 = vector.broadcast %37 : vector<1x8xf32> to vector<8x8xf32>
    %39 = arith.subf %32, %38 : vector<8x8xf32>
    %40 = arith.mulf %39, %39 : vector<8x8xf32>
    %cst_18 = arith.constant dense<0.000000e+00> : vector<8xf32>
    %41 = vector.multi_reduction <add>, %40, %cst_18 [0] : vector<8x8xf32> to vector<8xf32>
    %42 = vector.shape_cast %41 : vector<8xf32> to vector<1x8xf32>
    %cst_19 = arith.constant 0.142857149 : f32
    %43 = vector.broadcast %cst_19 : f32 to vector<1x8xf32>
    %44 = arith.mulf %42, %43 : vector<1x8xf32>
    %cst_20 = arith.constant 9.99999974E-6 : f32
    %45 = vector.broadcast %cst_20 : f32 to vector<1x8xf32>
    %46 = arith.addf %44, %45 : vector<1x8xf32>
    %47 = math.rsqrt %46 : vector<1x8xf32>
    %48 = vector.broadcast %37 : vector<1x8xf32> to vector<8x8xf32>
    %49 = arith.subf %32, %48 : vector<8x8xf32>
    %50 = vector.broadcast %47 : vector<1x8xf32> to vector<8x8xf32>
    %51 = arith.mulf %49, %50 : vector<8x8xf32>
    %52 = vector.broadcast %25 : vector<1x8xf32> to vector<8x8xf32>
    %53 = arith.mulf %52, %51 : vector<8x8xf32>
    %54 = vector.broadcast %26 : vector<1x8xf32> to vector<8x8xf32>
    %55 = arith.addf %53, %54 : vector<8x8xf32>
    %cst_21 = arith.constant 9.99999974E-6 : f32
    %56 = vector.broadcast %cst_21 : f32 to vector<1x8xf32>
    %57 = arith.addf %44, %56 : vector<1x8xf32>
    %58 = math.log %57 : vector<1x8xf32>
    %cst_22 = arith.constant 5.000000e-01 : f32
    %59 = vector.broadcast %cst_22 : f32 to vector<1x8xf32>
    %60 = arith.mulf %59, %58 : vector<1x8xf32>
    %61 = arith.subf %27, %60 : vector<1x8xf32>
    %62 = arith.addf %2, %61 : vector<1x8xf32>
    %c76 = arith.constant 76 : index
    %c0_23 = arith.constant 0 : index
    %63 = vector.load %arg1[%c76, %c0_23] : memref<152x32xf32, #tpu.memory_space<vmem>>, vector<8x32xf32>
    %c148 = arith.constant 148 : index
    %c0_24 = arith.constant 0 : index
    %64 = vector.load %arg1[%c148, %c0_24] : memref<152x32xf32, #tpu.memory_space<vmem>>, vector<1x32xf32>
    %cst_25 = arith.constant dense<0.000000e+00> : vector<8x32xf32>
    %65 = tpu.matmul %55, %63, %cst_25 {dimension_numbers = #tpu.dot_dimension_numbers<[1], [0], [0], [1], [0, 0, 1, 1], [], []>} : vector<8x8xf32>, vector<8x32xf32>, vector<8x32xf32> -> vector<8x32xf32>
    %66 = vector.broadcast %64 : vector<1x32xf32> to vector<8x32xf32>
    %67 = arith.addf %65, %66 : vector<8x32xf32>
    %c84 = arith.constant 84 : index
    %c0_26 = arith.constant 0 : index
    %68 = vector.load %arg1[%c84, %c0_26] : memref<152x32xf32, #tpu.memory_space<vmem>>, vector<32x32xf32>
    %c149 = arith.constant 149 : index
    %c0_27 = arith.constant 0 : index
    %69 = vector.load %arg1[%c149, %c0_27] : memref<152x32xf32, #tpu.memory_space<vmem>>, vector<1x32xf32>
    %cst_28 = arith.constant 0.000000e+00 : f32
    %70 = vector.broadcast %cst_28 : f32 to vector<8x32xf32>
    %71 = arith.maximumf %67, %70 : vector<8x32xf32>
    %cst_29 = arith.constant dense<0.000000e+00> : vector<8x32xf32>
    %72 = tpu.matmul %71, %68, %cst_29 {dimension_numbers = #tpu.dot_dimension_numbers<[1], [0], [0], [1], [0, 0, 1, 1], [], []>} : vector<8x32xf32>, vector<32x32xf32>, vector<8x32xf32> -> vector<8x32xf32>
    %73 = vector.broadcast %69 : vector<1x32xf32> to vector<8x32xf32>
    %74 = arith.addf %72, %73 : vector<8x32xf32>
    %cst_30 = arith.constant 0.000000e+00 : f32
    %75 = vector.broadcast %cst_30 : f32 to vector<8x32xf32>
    %76 = arith.maximumf %74, %75 : vector<8x32xf32>
    %c116 = arith.constant 116 : index
    %c0_31 = arith.constant 0 : index
    %77 = vector.load %arg1[%c116, %c0_31] : memref<152x32xf32, #tpu.memory_space<vmem>>, vector<32x32xf32>
    %c150 = arith.constant 150 : index
    %c0_32 = arith.constant 0 : index
    %78 = vector.load %arg1[%c150, %c0_32] : memref<152x32xf32, #tpu.memory_space<vmem>>, vector<1x32xf32>
    %c151 = arith.constant 151 : index
    %c0_33 = arith.constant 0 : index
    %79 = vector.load %arg1[%c151, %c0_33] : memref<152x32xf32, #tpu.memory_space<vmem>>, vector<1x32xf32>
    %cst_34 = arith.constant dense<0.000000e+00> : vector<8x32xf32>
    %80 = tpu.matmul %76, %77, %cst_34 {dimension_numbers = #tpu.dot_dimension_numbers<[1], [0], [0], [1], [0, 0, 1, 1], [], []>} : vector<8x32xf32>, vector<32x32xf32>, vector<8x32xf32> -> vector<8x32xf32>
    %81 = vector.broadcast %78 : vector<1x32xf32> to vector<8x32xf32>
    %82 = arith.addf %80, %81 : vector<8x32xf32>
    %83 = vector.extract_strided_slice %82 {offsets = [0, 0], sizes = [8, 8], strides = [1, 1]} : vector<8x32xf32> to vector<8x8xf32>
    %84 = vector.extract_strided_slice %82 {offsets = [0, 8], sizes = [8, 8], strides = [1, 1]} : vector<8x32xf32> to vector<8x8xf32>
    %85 = vector.extract_strided_slice %78 {offsets = [0, 16], sizes = [1, 8], strides = [1, 1]} : vector<1x32xf32> to vector<1x8xf32>
    %86 = vector.extract_strided_slice %78 {offsets = [0, 24], sizes = [1, 8], strides = [1, 1]} : vector<1x32xf32> to vector<1x8xf32>
    %87 = vector.extract_strided_slice %79 {offsets = [0, 0], sizes = [1, 8], strides = [1, 1]} : vector<1x32xf32> to vector<1x8xf32>
    %88 = arith.subf %55, %83 : vector<8x8xf32>
    %cst_35 = arith.constant 0.000000e+00 : f32
    %89 = vector.broadcast %cst_35 : f32 to vector<8x8xf32>
    %90 = arith.subf %89, %84 : vector<8x8xf32>
    %91 = math.exp %90 : vector<8x8xf32>
    %92 = arith.mulf %88, %91 : vector<8x8xf32>
    %93 = arith.subf %33, %84 : vector<8x8xf32>
    %cst_36 = arith.constant dense<0.000000e+00> : vector<8xf32>
    %94 = vector.multi_reduction <add>, %92, %cst_36 [0] : vector<8x8xf32> to vector<8xf32>
    %95 = vector.shape_cast %94 : vector<8xf32> to vector<1x8xf32>
    %cst_37 = arith.constant 8.000000e+00 : f32
    %96 = vector.broadcast %cst_37 : f32 to vector<1x8xf32>
    %97 = arith.divf %95, %96 : vector<1x8xf32>
    %98 = vector.broadcast %97 : vector<1x8xf32> to vector<8x8xf32>
    %99 = arith.subf %92, %98 : vector<8x8xf32>
    %100 = arith.mulf %99, %99 : vector<8x8xf32>
    %cst_38 = arith.constant dense<0.000000e+00> : vector<8xf32>
    %101 = vector.multi_reduction <add>, %100, %cst_38 [0] : vector<8x8xf32> to vector<8xf32>
    %102 = vector.shape_cast %101 : vector<8xf32> to vector<1x8xf32>
    %cst_39 = arith.constant 0.142857149 : f32
    %103 = vector.broadcast %cst_39 : f32 to vector<1x8xf32>
    %104 = arith.mulf %102, %103 : vector<1x8xf32>
    %cst_40 = arith.constant 9.99999974E-6 : f32
    %105 = vector.broadcast %cst_40 : f32 to vector<1x8xf32>
    %106 = arith.addf %104, %105 : vector<1x8xf32>
    %107 = math.rsqrt %106 : vector<1x8xf32>
    %108 = vector.broadcast %97 : vector<1x8xf32> to vector<8x8xf32>
    %109 = arith.subf %92, %108 : vector<8x8xf32>
    %110 = vector.broadcast %107 : vector<1x8xf32> to vector<8x8xf32>
    %111 = arith.mulf %109, %110 : vector<8x8xf32>
    %112 = vector.broadcast %85 : vector<1x8xf32> to vector<8x8xf32>
    %113 = arith.mulf %112, %111 : vector<8x8xf32>
    %114 = vector.broadcast %86 : vector<1x8xf32> to vector<8x8xf32>
    %115 = arith.addf %113, %114 : vector<8x8xf32>
    %cst_41 = arith.constant 9.99999974E-6 : f32
    %116 = vector.broadcast %cst_41 : f32 to vector<1x8xf32>
    %117 = arith.addf %104, %116 : vector<1x8xf32>
    %118 = math.log %117 : vector<1x8xf32>
    %cst_42 = arith.constant 5.000000e-01 : f32
    %119 = vector.broadcast %cst_42 : f32 to vector<1x8xf32>
    %120 = arith.mulf %119, %118 : vector<1x8xf32>
    %121 = arith.subf %87, %120 : vector<1x8xf32>
    %122 = arith.addf %62, %121 : vector<1x8xf32>
    %123 = vector.broadcast %122 : vector<1x8xf32> to vector<8x8xf32>
    %124 = arith.addf %93, %123 : vector<8x8xf32>
    %125 = tpu.concatenate %115, %124 in 1 : vector<8x8xf32>, vector<8x8xf32> -> vector<8x16xf32>
    %c0_43 = arith.constant 0 : index
    %c0_44 = arith.constant 0 : index
    %126 = vector.load %arg2[%c0_43, %c0_44] : memref<8x16xf32, #tpu.memory_space<vmem>>, vector<8x16xf32>
    tpu.vector_store %arg2[%c0_43, %c0_44], %125 {strides = array<i32>} : memref<8x16xf32, #tpu.memory_space<vmem>>, vector<8x16xf32>,
    return
  }
}

</mosaic_0001>

<llo_original>
// kernel: maf_forward.1
$region0: #{maf_forward.1}
  #allocation0 [shape = 'u32[]', space=smem, size = 0x4, offset = 0x4, fixed_abs, tag = 'smem constant byte address 0x4 - core index']
  #allocation1 [shape = 'u32[72,128]{1,0:T(1,128)}', space=vmem, size = 0x9000, scoped, tag = 'internal scratch']
  %s0 = inlined_call_operand.vmem [shape: f32[8,8], index: 0, kind: input, shape index: {}]
  %s1 = inlined_call_operand.vmem [shape: f32[152,32], index: 1, kind: input, shape index: {}]
  %s2 = inlined_call_operand.vmem [shape: f32[8,16], index: 2, kind: output, shape index: {}]
  %s3 = sld [smem:[#allocation0]]
  $region18: #{maf_forward.1} parent=0
    _
  %s5 = ssub.s32 1, %s3
  %s6 = scalar_select 0, %s5, %s3
  // Predicated region
  $region2: #{maf_forward.1} parent=0 // pred_check
    _
  $region3: #{maf_forward.1} parent=0 // pred_check_branch
    %8 = sbr.rel (0) target = $region5
  $region4: #{maf_forward.1} parent=0 // pred_region
    _
  $region5: #{maf_forward.1} parent=0 // pred_fallthru
    _
  // Predicated region
  $region6: #{maf_forward.1} parent=0 // pred_check
    _
  $region7: #{maf_forward.1} parent=0 // pred_check_branch
    %10 = sbr.rel (0) target = $region9
  $region8: #{maf_forward.1} parent=0 // pred_region
    _
  $region9: #{maf_forward.1} parent=0 // pred_fallthru
    _
  %v11 = vld [vmem:[%s0] sm:$0xff]
  %v12 = vld [vmem:[%s1] sm:$0xff]
  %v13 = vld [vmem:[%s1 + $0x48] sm:$0x1]
  %v14 = vperm.slane %v13, 0
  %vm15 = vcmask 64512
  %v17 = vsel %vm15, %v11, 0
  %19 = vmatpush.msra.mxu0 0.0
  %20 = vmatpush.msra.mxu0 0.0
  %21 = vmatpush.msra.mxu0 0.0
  %22 = vmatpush.msra.mxu0 0.0
  %23 = vmatpush.msra.mxu0 0.0
  %24 = vmatpush.msra.mxu0 0.0
  %25 = vmatpush.msra.mxu0 0.0
  %26 = vmatpush.msra.mxu0 0.0
  %27 = vmatpush.msra.mxu0 0.0
  %28 = vmatpush.msra.mxu0 0.0
  %29 = vmatpush.msra.mxu0 0.0
  %30 = vmatpush.msra.mxu0 0.0
  %31 = vmatpush.msra.mxu0 0.0
  %32 = vmatpush.msra.mxu0 0.0
  %33 = vmatpush.msra.mxu0 0.0
  %34 = vmatpush.msra.mxu0 %v12
  %35 = vmatmul.f32.gmra.mxu0 %v17
  %v36 = vpop.f32.mrf.mxu0
  %v37 = vadd.f32 %v14, %v36
  %38 = vdwg.mxu0
  %v39 = vld [vmem:[%s1 + $0x8] sm:$0xff]
  %v40 = vld [vmem:[%s1 + $0x10] sm:$0xff]
  %v41 = vld [vmem:[%s1 + $0x18] sm:$0xff]
  %v42 = vld [vmem:[%s1 + $0x20] sm:$0xff]
  %v43 = vld [vmem:[%s1 + $0x49] sm:$0x1]
  %v44 = vmax.f32 %v37, 0.0
  %v45 = vperm.slane %v43, 0
  %vm46 = vcmask 261120
  %v48 = vsel %vm46, %v44, 0
  %50 = vmatpush.msra.mxu0 0.0
  %51 = vmatpush.msra.mxu0 0.0
  %52 = vmatpush.msra.mxu0 0.0
  %53 = vmatpush.msra.mxu0 0.0
  %54 = vmatpush.msra.mxu0 0.0
  %55 = vmatpush.msra.mxu0 0.0
  %56 = vmatpush.msra.mxu0 0.0
  %57 = vmatpush.msra.mxu0 0.0
  %58 = vmatpush.msra.mxu0 0.0
  %59 = vmatpush.msra.mxu0 0.0
  %60 = vmatpush.msra.mxu0 0.0
  %61 = vmatpush.msra.mxu0 0.0
  %62 = vmatpush.msra.mxu0 %v42
  %63 = vmatpush.msra.mxu0 %v41
  %64 = vmatpush.msra.mxu0 %v40
  %65 = vmatpush.msra.mxu0 %v39
  %66 = vmatmul.f32.gmra.mxu0 %v48
  %v67 = vpop.f32.mrf.mxu0
  %v68 = vadd.f32 %v45, %v67
  %69 = vdwg.mxu0
  %v70 = vmax.f32 %v68, 0.0
  %v71 = vld [vmem:[%s1 + $0x28] sm:$0xff]
  %v72 = vld [vmem:[%s1 + $0x30] sm:$0xff]
  %v73 = vld [vmem:[%s1 + $0x38] sm:$0xff]
  %v74 = vld [vmem:[%s1 + $0x40] sm:$0xff]
  %v75 = vld [vmem:[%s1 + $0x4a] sm:$0x1]
  %v76 = vld [vmem:[%s1 + $0x4b] sm:$0x1]
  %v77 = vperm.slane %v75, 0
  %v79 = vsel %vm46, %v70, 0
  %81 = vmatpush.msra.mxu0 0.0
  %82 = vmatpush.msra.mxu0 0.0
  %83 = vmatpush.msra.mxu0 0.0
  %84 = vmatpush.msra.mxu0 0.0
  %85 = vmatpush.msra.mxu0 0.0
  %86 = vmatpush.msra.mxu0 0.0
  %87 = vmatpush.msra.mxu0 0.0
  %88 = vmatpush.msra.mxu0 0.0
  %89 = vmatpush.msra.mxu0 0.0
  %90 = vmatpush.msra.mxu0 0.0
  %91 = vmatpush.msra.mxu0 0.0
  %92 = vmatpush.msra.mxu0 0.0
  %93 = vmatpush.msra.mxu0 %v74
  %94 = vmatpush.msra.mxu0 %v73
  %95 = vmatpush.msra.mxu0 %v72
  %96 = vmatpush.msra.mxu0 %v71
  %97 = vmatmul.f32.gmra.mxu0 %v79
  %v98 = vpop.f32.mrf.mxu0
  %v99 = vadd.f32 %v77, %v98
  %100 = vdwg.mxu0
  %v101 = vsub.f32 %v11, %v99
  %v102 = vsub.f32 0.0, %v99
  %v103 = vmul.f32 %v102, 1.442695
  %v104 = vpow.pop %v103
  %106 = vrot.lane.b32.xlu0 %v104, 120
  %v107 = vpop.permute.xlu0 %106
  %v109 = vmul.f32 %v101, %v107
  %v110 = vsel %vm15, %v109, 0.0
  %v111 = vrot.slane %v110, 4
  %v112 = vadd.f32 %v110, %v111
  %v113 = vrot.slane %v112, 2
  %v114 = vadd.f32 %v112, %v113
  %v115 = vrot.slane %v114, 1
  %v116 = vadd.f32 %v114, %v115
  %v117 = vrcp.pop 8.0
  %v118 = vmul.f32 8.0, %v117
  %v119 = vsub.f32 1.0, %v118
  %v120 = vmul.f32 %v117, %v119
  %v121 = vadd.f32 %v117, %v120
  %vm122 = vweird.f32 %v117
  %v123 = vsel %vm122, %v117, %v121
  %v124 = vmul.f32 %v116, %v123
  %v125 = vsub.f32 %v109, %v124
  %v126 = vmul.f32 %v125, %v125
  %v127 = vsel %vm15, %v126, 0.0
  %v128 = vrot.slane %v127, 4
  %v129 = vadd.f32 %v127, %v128
  %v130 = vrot.slane %v129, 2
  %v131 = vadd.f32 %v129, %v130
  %v132 = vrot.slane %v131, 1
  %v133 = vadd.f32 %v131, %v132
  %v134 = vmul.f32 %v133, 0.14285715
  %v135 = vadd.f32 %v134, 1e-05
  %v136 = vrsqrt.pop %v135
  %v137 = vmul.f32 %v136, %v135
  %v138 = vmul.f32 %v137, %v136
  %v139 = vmul.f32 0.5, %v138
  %v140 = vsub.f32 1.5, %v139
  %v141 = vmul.f32 %v136, %v140
  %vm142 = vweird.f32 %v135
  %vm143 = vweird.f32 %v136
  %vm144 = vmor %vm142, %vm143
  %v145 = vsel %vm144, %v136, %v141
  %v146 = vmul.f32 %v125, %v145
  %148 = vrot.lane.b32.xlu0 %v146, 16
  %v149 = vpop.permute.xlu0 %148
  %v151 = vmul.f32 %v77, %v149
  %153 = vrot.lane.b32.xlu0 %v77, 120
  %v154 = vpop.permute.xlu0 %153
  %v156 = vadd.f32 %v151, %v154
  %v157 = vlog2.pop %v135
  %v158 = vmul.f32 %v157, 0.6931472
  %v159 = vmul.f32 %v158, 0.5
  %v160 = vsub.f32 %v76, %v159
  %v161 = vadd.f32 %v160, 0.0
  %v162 = vld [vmem:[%s1 + $0x4c] sm:$0xff]
  %v163 = vld [vmem:[%s1 + $0x94] sm:$0x1]
  %v164 = vperm.slane %v163, 0
  %166 = vrot.lane.b32.xlu0 %v156, 112
  %v167 = vpop.permute.xlu0 %166
  %v168 = vsel %vm15, %v167, 0
  %170 = vmatpush.msra.mxu0 0.0
  %171 = vmatpush.msra.mxu0 0.0
  %172 = vmatpush.msra.mxu0 0.0
  %173 = vmatpush.msra.mxu0 0.0
  %174 = vmatpush.msra.mxu0 0.0
  %175 = vmatpush.msra.mxu0 0.0
  %176 = vmatpush.msra.mxu0 0.0
  %177 = vmatpush.msra.mxu0 0.0
  %178 = vmatpush.msra.mxu0 0.0
  %179 = vmatpush.msra.mxu0 0.0
  %180 = vmatpush.msra.mxu0 0.0
  %181 = vmatpush.msra.mxu0 0.0
  %182 = vmatpush.msra.mxu0 0.0
  %183 = vmatpush.msra.mxu0 0.0
  %184 = vmatpush.msra.mxu0 0.0
  %185 = vmatpush.msra.mxu0 %v162
  %186 = vmatmul.f32.gmra.mxu0 %v168
  %v187 = vpop.f32.mrf.mxu0
  %v188 = vadd.f32 %v164, %v187
  %189 = vdwg.mxu0
  %v190 = vld [vmem:[%s1 + $0x54] sm:$0xff]
  %v191 = vld [vmem:[%s1 + $0x5c] sm:$0xff]
  %v192 = vld [vmem:[%s1 + $0x64] sm:$0xff]
  %v193 = vld [vmem:[%s1 + $0x6c] sm:$0xff]
  %v194 = vld [vmem:[%s1 + $0x95] sm:$0x1]
  %v195 = vmax.f32 %v188, 0.0
  %v196 = vperm.slane %v194, 0
  %v198 = vsel %vm46, %v195, 0
  %200 = vmatpush.msra.mxu0 0.0
  %201 = vmatpush.msra.mxu0 0.0
  %202 = vmatpush.msra.mxu0 0.0
  %203 = vmatpush.msra.mxu0 0.0
  %204 = vmatpush.msra.mxu0 0.0
  %205 = vmatpush.msra.mxu0 0.0
  %206 = vmatpush.msra.mxu0 0.0
  %207 = vmatpush.msra.mxu0 0.0
  %208 = vmatpush.msra.mxu0 0.0
  %209 = vmatpush.msra.mxu0 0.0
  %210 = vmatpush.msra.mxu0 0.0
  %211 = vmatpush.msra.mxu0 0.0
  %212 = vmatpush.msra.mxu0 %v193
  %213 = vmatpush.msra.mxu0 %v192
  %214 = vmatpush.msra.mxu0 %v191
  %215 = vmatpush.msra.mxu0 %v190
  %216 = vmatmul.f32.gmra.mxu0 %v198
  %v217 = vpop.f32.mrf.mxu0
  %v218 = vadd.f32 %v196, %v217
  %219 = vdwg.mxu0
  %v220 = vmax.f32 %v218, 0.0
  %v221 = vld [vmem:[%s1 + $0x74] sm:$0xff]
  %v222 = vld [vmem:[%s1 + $0x7c] sm:$0xff]
  %v223 = vld [vmem:[%s1 + $0x84] sm:$0xff]
  %v224 = vld [vmem:[%s1 + $0x8c] sm:$0xff]
  %v225 = vld [vmem:[%s1 + $0x96] sm:$0x1]
  %v226 = vld [vmem:[%s1 + $0x97] sm:$0x1]
  %v227 = vperm.slane %v225, 0
  %v229 = vsel %vm46, %v220, 0
  %231 = vmatpush.msra.mxu0 0.0
  %232 = vmatpush.msra.mxu0 0.0
  %233 = vmatpush.msra.mxu0 0.0
  %234 = vmatpush.msra.mxu0 0.0
  %235 = vmatpush.msra.mxu0 0.0
  %236 = vmatpush.msra.mxu0 0.0
  %237 = vmatpush.msra.mxu0 0.0
  %238 = vmatpush.msra.mxu0 0.0
  %239 = vmatpush.msra.mxu0 0.0
  %240 = vmatpush.msra.mxu0 0.0
  %241 = vmatpush.msra.mxu0 0.0
  %242 = vmatpush.msra.mxu0 0.0
  %243 = vmatpush.msra.mxu0 %v224
  %244 = vmatpush.msra.mxu0 %v223
  %245 = vmatpush.msra.mxu0 %v222
  %246 = vmatpush.msra.mxu0 %v221
  %247 = vmatmul.f32.gmra.mxu0 %v229
  %v248 = vpop.f32.mrf.mxu0
  %v249 = vadd.f32 %v227, %v248
  %250 = vdwg.mxu0
  %252 = vrot.lane.b32.xlu0 %v249, 16
  %v253 = vpop.permute.xlu0 %252
  %v255 = vsub.f32 %v156, %v253
  %v256 = vsub.f32 0.0, %v249
  %v257 = vmul.f32 %v256, 1.442695
  %v258 = vpow.pop %v257
  %260 = vrot.lane.b32.xlu0 %v258, 8
  %v261 = vpop.permute.xlu0 %260
  %v263 = vmul.f32 %v255, %v261
  %v264 = vsub.f32 %v102, %v249
  %vm265 = vcmask 195712
  %v266 = vsel %vm265, %v263, 0.0
  %v267 = vrot.slane %v266, 4
  %v268 = vadd.f32 %v266, %v267
  %v269 = vrot.slane %v268, 2
  %v270 = vadd.f32 %v268, %v269
  %v271 = vrot.slane %v270, 1
  %v272 = vadd.f32 %v270, %v271
  %v273 = vmul.f32 %v272, %v123
  %v274 = vsub.f32 %v263, %v273
  %v275 = vmul.f32 %v274, %v274
  %v276 = vsel %vm265, %v275, 0.0
  %v277 = vrot.slane %v276, 4
  %v278 = vadd.f32 %v276, %v277
  %v279 = vrot.slane %v278, 2
  %v280 = vadd.f32 %v278, %v279
  %v281 = vrot.slane %v280, 1
  %v282 = vadd.f32 %v280, %v281
  %v283 = vmul.f32 %v282, 0.14285715
  %v284 = vadd.f32 %v283, 1e-05
  %v285 = vrsqrt.pop %v284
  %v286 = vmul.f32 %v285, %v284
  %v287 = vmul.f32 %v286, %v285
  %v288 = vmul.f32 0.5, %v287
  %v289 = vsub.f32 1.5, %v288
  %v290 = vmul.f32 %v285, %v289
  %vm291 = vweird.f32 %v284
  %vm292 = vweird.f32 %v285
  %vm293 = vmor %vm291, %vm292
  %v294 = vsel %vm293, %v285, %v290
  %v295 = vmul.f32 %v274, %v294
  %v296 = vmul.f32 %v227, %v295
  %298 = vrot.lane.b32.xlu0 %v227, 120
  %v299 = vpop.permute.xlu0 %298
  %v301 = vadd.f32 %v296, %v299
  %v302 = vlog2.pop %v284
  %v303 = vmul.f32 %v302, 0.6931472
  %v304 = vmul.f32 %v303, 0.5
  %306 = vrot.lane.b32.xlu0 %v304, 112
  %v307 = vpop.permute.xlu0 %306
  %v309 = vsub.f32 %v226, %v307
  %v310 = vadd.f32 %v161, %v309
  %v311 = vperm.slane %v310, 0
  %313 = vrot.lane.b32.xlu0 %v311, 8
  %v314 = vpop.permute.xlu0 %313
  %v316 = vadd.f32 %v264, %v314
  %318 = vrot.lane.b32.xlu0 %v301, 112
  %v319 = vpop.permute.xlu0 %318
  %v321 = vsel %vm15, %v319, %v316
  %vm322 = vcmask 130048
  %323 = vst.msk [vmem:[%s2] sm:$0xff] %vm322, %v321
  // Predicated region
  $region10: #{maf_forward.1} parent=0 // pred_check
    _
  $region11: #{maf_forward.1} parent=0 // pred_check_branch
    %325 = sbr.rel (0) target = $region13
  $region12: #{maf_forward.1} parent=0 // pred_region
    _
  $region13: #{maf_forward.1} parent=0 // pred_fallthru
    _
  // Predicated region
  $region14: #{maf_forward.1} parent=0 // pred_check
    _
  $region15: #{maf_forward.1} parent=0 // pred_check_branch
    %327 = sbr.rel (0) target = $region17
  $region16: #{maf_forward.1} parent=0 // pred_region
    _
  $region17: #{maf_forward.1} parent=0 // pred_fallthru
    _

</llo_original>
